<compile_context>
chip_gen: v5e
topology: v5e:2x2
jax: 0.10.0
libtpu: 0.0.40
codegen_flags: <defaults>
</compile_context>

<pallas_src>
import functools

import jax
import jax.numpy as jnp
from jax.experimental import pallas as pl
from jax.experimental.pallas import tpu as pltpu


def _round_up(n, m):
    return ((n + m - 1) // m) * m


# ---------------------------------------------------------------------------
# Fused kernel: whole MLP (all Linear + ReLU layers) in one body.
# Weights and biases arrive as two packed VMEM blobs; per-layer views are
# carved with static slices.
# ---------------------------------------------------------------------------
def _fused_mlp_kernel(x_ref, w_ref, b_ref, o_ref, *, layer_dims, col_offsets):
    h = x_ref[...]                                  # (tm, in_features) f32
    n_layers = len(layer_dims)
    for i, (in_f, out_f) in enumerate(layer_dims):
        off = col_offsets[i]
        w = w_ref[:in_f, off:off + out_f]           # (in_f, out_f) static view
        b = b_ref[:, off:off + out_f]               # (1,    out_f) static view
        h = jnp.dot(h, w, preferred_element_type=jnp.float32) + b
        if i < n_layers - 1:                        # ReLU on all but last layer
            h = jnp.maximum(h, 0.0)
    o_ref[...] = h.astype(o_ref.dtype)


# ---------------------------------------------------------------------------
# One-time parameter preparation (outside the per-forward hot path):
# transpose each (out,in) weight to (in,out) and pack every layer into a
# single weight blob (rows = max fan-in, cols = sum of fan-outs) plus a single
# bias blob.  Natural, unpadded feature sizes.
# ---------------------------------------------------------------------------
def prepare_params(params):
    layer_dims = tuple((int(w.shape[1]), int(w.shape[0])) for (w, _) in params)
    max_in = max(d[0] for d in layer_dims)
    total_out = sum(d[1] for d in layer_dims)

    w_blob = jnp.zeros((max_in, total_out), jnp.float32)
    b_blob = jnp.zeros((1, total_out), jnp.float32)
    col_offsets = []
    off = 0
    for (w, b), (in_f, out_f) in zip(params, layer_dims):
        w_blob = w_blob.at[:in_f, off:off + out_f].set(
            jnp.transpose(jnp.asarray(w, jnp.float32)))
        b_blob = b_blob.at[0, off:off + out_f].set(jnp.asarray(b, jnp.float32))
        col_offsets.append(off)
        off += out_f
    return (w_blob, b_blob), layer_dims, tuple(col_offsets)


# ---------------------------------------------------------------------------
# Forward pass: single fused pallas_call, batch tiled over a "parallel" grid
# axis; weights/biases DMA'd once (constant index_map) and kept VMEM-resident.
# ---------------------------------------------------------------------------
def mlp_forward(x, packed, layer_dims, col_offsets, *, block_m=128):
    w_blob, b_blob = packed
    x = jnp.asarray(x, dtype=jnp.float32)
    if x.ndim == 1:
        x = x[None, :]
    batch = x.shape[0]
    in_f = layer_dims[0][0]
    out_f = layer_dims[-1][1]

    # Batch tiling: tm is a multiple of 8 (sublane rule); pad rows if needed.
    tm = min(block_m, _round_up(batch, 8))
    padded_batch = _round_up(batch, tm)
    if padded_batch != batch:
        x = jnp.pad(x, ((0, padded_batch - batch), (0, 0)))
    grid = (padded_batch // tm,)

    kernel = functools.partial(
        _fused_mlp_kernel, layer_dims=layer_dims, col_offsets=col_offsets)

    y = pl.pallas_call(
        kernel,
        out_shape=jax.ShapeDtypeStruct((padded_batch, out_f), jnp.float32),
        grid=grid,
        in_specs=[
            # activations: one tile of rows per grid step
            pl.BlockSpec((tm, in_f), lambda i: (i, 0)),
            # weights / biases: constant index_map -> DMA'd once, resident
            pl.BlockSpec(w_blob.shape, lambda i: (0, 0)),
            pl.BlockSpec(b_blob.shape, lambda i: (0, 0)),
        ],
        out_specs=pl.BlockSpec((tm, out_f), lambda i: (i, 0)),
        compiler_params=pltpu.CompilerParams(
            dimension_semantics=("parallel",)),
    )(x, w_blob, b_blob)

    return y[:batch]


# ---------------------------------------------------------------------------
# Deterministic init mimicking nn.Linear default (uniform +/- 1/sqrt(fan_in)).
# ---------------------------------------------------------------------------
def init_params(key, layers):
    params = []
    for (fan_in, fan_out) in layers:
        key, kw, kb = jax.random.split(key, 3)
        bound = 1.0 / jnp.sqrt(jnp.float32(fan_in))
        w = jax.random.uniform(kw, (fan_out, fan_in), jnp.float32, -bound, bound)
        b = jax.random.uniform(kb, (fan_out,), jnp.float32, -bound, bound)
        params.append((w, b))
    return params


def _reference(x, params):
    ref = jnp.asarray(x, jnp.float32)
    for i, (w, b) in enumerate(params):
        ref = ref @ w.T + b
        if i < len(params) - 1:
            ref = jnp.maximum(ref, 0.0)
    return ref


if __name__ == "__main__":
    key = jax.random.PRNGKey(0)

    # layers as passed to Model.__init__: [(in, out), ...]
    layer_sizes = [(16, 32), (32, 32), (32, 4)]
    out_features = layer_sizes[-1][1]

    params = init_params(key, layer_sizes)
    # one-time layout prep (transpose + packing) — outside the hot path
    packed, layer_dims, col_offsets = prepare_params(params)

    forward = jax.jit(functools.partial(
        mlp_forward, layer_dims=layer_dims, col_offsets=col_offsets))

    # --- small batch (single grid step) ------------------------------------
    key, kx = jax.random.split(key)
    x_small = jax.random.normal(kx, (8, layer_sizes[0][0]), jnp.float32)
    out_small = forward(x_small, packed)
    jax.block_until_ready(out_small)
    assert out_small.shape == (8, out_features)
    assert jnp.allclose(out_small, _reference(x_small, params),
                        atol=1e-5, rtol=1e-5)

    # --- larger batch (exercises row padding + multi-step "parallel" grid) --
    key, kx2 = jax.random.split(key)
    x_big = jax.random.normal(kx2, (200, layer_sizes[0][0]), jnp.float32)
    out_big = forward(x_big, packed)
    jax.block_until_ready(out_big)
    assert out_big.shape == (200, out_features)
    assert jnp.allclose(out_big, _reference(x_big, params),
                        atol=1e-5, rtol=1e-5)

    print("KERNEL_OK")
</pallas_src>

<mosaic_0001>
module attributes {stable_mosaic.version = 11 : i64} {
  func.func @_fused_mlp_kernel(%arg0: i32, %arg1: memref<8x16xf32, #tpu.memory_space<vmem>>, %arg2: memref<32x68xf32, #tpu.memory_space<vmem>>, %arg3: memref<1x68xf32, #tpu.memory_space<vmem>>, %arg4: memref<8x4xf32, #tpu.memory_space<vmem>>) attributes {dimension_semantics = [#tpu.dimension_semantics<parallel>], iteration_bounds = array<i64: 1>, scalar_prefetch = 0 : i64, scratch_operands = 0 : i64, tpu.core_type = #tpu.core_type<tc>, window_params = [{transform_indices = @transform_0, window_bounds = array<i64: 8, 16>}, {pipeline_mode = #tpu.pipeline_mode<synchronous>, transform_indices = @transform_1, window_bounds = array<i64: 32, 68>}, {pipeline_mode = #tpu.pipeline_mode<synchronous>, transform_indices = @transform_2, window_bounds = array<i64: 1, 68>}, {transform_indices = @transform_3, window_bounds = array<i64: 8, 4>}]} {
    %c0 = arith.constant 0 : index
    %c0_0 = arith.constant 0 : index
    %0 = vector.load %arg1[%c0, %c0_0] : memref<8x16xf32, #tpu.memory_space<vmem>>, vector<8x16xf32>
    %c0_1 = arith.constant 0 : index
    %c0_2 = arith.constant 0 : index
    %1 = vector.load %arg2[%c0_1, %c0_2] : memref<32x68xf32, #tpu.memory_space<vmem>>, vector<16x32xf32>
    %c0_3 = arith.constant 0 : index
    %c0_4 = arith.constant 0 : index
    %2 = vector.load %arg3[%c0_3, %c0_4] : memref<1x68xf32, #tpu.memory_space<vmem>>, vector<1x32xf32>
    %cst = arith.constant dense<0.000000e+00> : vector<8x32xf32>
    %3 = tpu.matmul %0, %1, %cst {dimension_numbers = #tpu.dot_dimension_numbers<[1], [0], [0], [1], [0, 0, 1, 1], [], []>} : vector<8x16xf32>, vector<16x32xf32>, vector<8x32xf32> -> vector<8x32xf32>
    %4 = vector.broadcast %2 : vector<1x32xf32> to vector<8x32xf32>
    %5 = arith.addf %3, %4 : vector<8x32xf32>
    %cst_5 = arith.constant 0.000000e+00 : f32
    %6 = vector.broadcast %cst_5 : f32 to vector<8x32xf32>
    %7 = arith.maximumf %5, %6 : vector<8x32xf32>
    %c0_6 = arith.constant 0 : index
    %c32 = arith.constant 32 : index
    %8 = vector.load %arg2[%c0_6, %c32] : memref<32x68xf32, #tpu.memory_space<vmem>>, vector<32x32xf32>
    %c0_7 = arith.constant 0 : index
    %c32_8 = arith.constant 32 : index
    %9 = vector.load %arg3[%c0_7, %c32_8] : memref<1x68xf32, #tpu.memory_space<vmem>>, vector<1x32xf32>
    %cst_9 = arith.constant dense<0.000000e+00> : vector<8x32xf32>
    %10 = tpu.matmul %7, %8, %cst_9 {dimension_numbers = #tpu.dot_dimension_numbers<[1], [0], [0], [1], [0, 0, 1, 1], [], []>} : vector<8x32xf32>, vector<32x32xf32>, vector<8x32xf32> -> vector<8x32xf32>
    %11 = vector.broadcast %9 : vector<1x32xf32> to vector<8x32xf32>
    %12 = arith.addf %10, %11 : vector<8x32xf32>
    %cst_10 = arith.constant 0.000000e+00 : f32
    %13 = vector.broadcast %cst_10 : f32 to vector<8x32xf32>
    %14 = arith.maximumf %12, %13 : vector<8x32xf32>
    %c0_11 = arith.constant 0 : index
    %c64 = arith.constant 64 : index
    %15 = vector.load %arg2[%c0_11, %c64] : memref<32x68xf32, #tpu.memory_space<vmem>>, vector<32x4xf32>
    %c0_12 = arith.constant 0 : index
    %c64_13 = arith.constant 64 : index
    %16 = vector.load %arg3[%c0_12, %c64_13] : memref<1x68xf32, #tpu.memory_space<vmem>>, vector<1x4xf32>
    %cst_14 = arith.constant dense<0.000000e+00> : vector<8x4xf32>
    %17 = tpu.matmul %14, %15, %cst_14 {dimension_numbers = #tpu.dot_dimension_numbers<[1], [0], [0], [1], [0, 0, 1, 1], [], []>} : vector<8x32xf32>, vector<32x4xf32>, vector<8x4xf32> -> vector<8x4xf32>
    %18 = vector.broadcast %16 : vector<1x4xf32> to vector<8x4xf32>
    %19 = arith.addf %17, %18 : vector<8x4xf32>
    %c0_15 = arith.constant 0 : index
    %c0_16 = arith.constant 0 : index
    %20 = vector.load %arg4[%c0_15, %c0_16] : memref<8x4xf32, #tpu.memory_space<vmem>>, vector<8x4xf32>
    tpu.vector_store %arg4[%c0_15, %c0_16], %19 {strides = array<i32>} : memref<8x4xf32, #tpu.memory_space<vmem>>, vector<8x4xf32>,
    return
  }
  func.func @transform_0(%arg0: i32) -> (i32, i32) {
    %c0_i32 = arith.constant 0 : i32
    %c0_i32_0 = arith.constant 0 : i32
    return %arg0, %c0_i32 : i32, i32
  }
  func.func @transform_1(%arg0: i32) -> (i32, i32) {
    %c0_i32 = arith.constant 0 : i32
    %c0_i32_0 = arith.constant 0 : i32
    %c0_i32_1 = arith.constant 0 : i32
    return %c0_i32, %c0_i32_0 : i32, i32
  }
  func.func @transform_2(%arg0: i32) -> (i32, i32) {
    %c0_i32 = arith.constant 0 : i32
    %c0_i32_0 = arith.constant 0 : i32
    %c0_i32_1 = arith.constant 0 : i32
    return %c0_i32, %c0_i32_0 : i32, i32
  }
  func.func @transform_3(%arg0: i32) -> (i32, i32) {
    %c0_i32 = arith.constant 0 : i32
    %c0_i32_0 = arith.constant 0 : i32
    return %arg0, %c0_i32 : i32, i32
  }
}

</mosaic_0001>

<llo_original>
// kernel: mlp_forward.1
$region0: #{mlp_forward.1}
  #allocation0 [shape = 'u32[]', space=smem, size = 0x4, offset = 0x4, fixed_abs, tag = 'smem constant byte address 0x4 - core index']
  #allocation1 [shape = 'u32[72,128]{1,0:T(1,128)}', space=vmem, size = 0x9000, scoped, tag = 'internal scratch']
  %s0 = inlined_call_operand.hbm [shape: f32[8,16], index: 0, kind: input, shape index: {}]
  %s1 = inlined_call_operand.hbm [shape: f32[32,68], index: 1, kind: input, shape index: {}]
  %s2 = inlined_call_operand.vmem [shape: f32[1,68], index: 2, kind: input, shape index: {}]
  %s3 = inlined_call_operand.vmem [shape: f32[8,4], index: 3, kind: output, shape index: {}]
  %s4 = sld [smem:[#allocation0]]
  $region30: #{mlp_forward.1} parent=0
    _
  %s6 = ssub.s32 1, %s4
  %s7 = scalar_select 0, %s6, %s4
  $region1: #{mlp_forward.1} parent=0
    #allocation2 [shape = 'u8[4096]{0}', space=vmem, size = 0x1000, scoped, tag = 'input window, operand 0, single buffered']
    #allocation3 [shape = 's32[1]{0}', space=sflag, size = 0x4, scoped, tag = 'scoped memory for mlp_forward.1']
    #allocation4 [shape = 'u8[16384]{0}', space=vmem, size = 0x4000, scoped, tag = 'input window, operand 1, single buffered']
    #allocation5 [shape = 's32[1]{0}', space=sflag, size = 0x4, scoped, tag = 'scoped memory for mlp_forward.1']
    %8 = vsyncpa [#allocation3], 0
    %9 = vsyncpa [#allocation5], 0
    // Predicated region
    $region2: #{mlp_forward.1} parent=1 // pred_check
      _
    $region3: #{mlp_forward.1} parent=1 // pred_check_branch
      %11 = sbr.rel (0) target = $region5
    $region4: #{mlp_forward.1} parent=1 // pred_region
      %13 = vsyncadd [#allocation3], 0
      %s15 = sshll.u32 %s0, 4
      %s16 = int_to_ptr.hbm [resolvable:$true] %s15
      %s17 = sshll.u32 [#allocation2], 4
      %s18 = int_to_ptr.vmem [resolvable:$true] %s17
      %20 = dma.hbm_to_vmem [thread:$0]  %s16, 128, %s18, [#allocation3]
    $region5: #{mlp_forward.1} parent=1 // pred_fallthru
      _
    // Predicated region
    $region6: #{mlp_forward.1} parent=1 // pred_check
      _
    $region7: #{mlp_forward.1} parent=1 // pred_check_branch
      %22 = sbr.rel (0) target = $region9
    $region8: #{mlp_forward.1} parent=1 // pred_region
      %24 = vsyncadd [#allocation5], 0
      %s25 = sshll.u32 %s1, 4
      %s26 = int_to_ptr.hbm [resolvable:$true] %s25
      %s27 = sshll.u32 [#allocation4], 4
      %s28 = int_to_ptr.vmem [resolvable:$true] %s27
      %33 = dma.hbm_to_vmem [thread:$0]  %s26, 512, %s28, [#allocation5], 128, 128, 8
    $region9: #{mlp_forward.1} parent=1 // pred_fallthru
      _
    // Predicated region
    $region10: #{mlp_forward.1} parent=1 // pred_check
      _
    $region11: #{mlp_forward.1} parent=1 // pred_check_branch
      %35 = sbr.rel (0) target = $region13
    $region12: #{mlp_forward.1} parent=1 // pred_region
      _
    $region13: #{mlp_forward.1} parent=1 // pred_fallthru
      _
    // Predicated region
    $region14: #{mlp_forward.1} parent=1 // pred_check
      _
    $region15: #{mlp_forward.1} parent=1 // pred_check_branch
      %37 = sbr.rel (0) target = $region17
    $region16: #{mlp_forward.1} parent=1 // pred_region
      %39 = dma.done [#allocation3], 128
    $region17: #{mlp_forward.1} parent=1 // pred_fallthru
      _
    // Predicated region
    $region18: #{mlp_forward.1} parent=1 // pred_check
      _
    $region19: #{mlp_forward.1} parent=1 // pred_check_branch
      %41 = sbr.rel (0) target = $region21
    $region20: #{mlp_forward.1} parent=1 // pred_region
      %43 = dma.done [#allocation5], 512
    $region21: #{mlp_forward.1} parent=1 // pred_fallthru
      _
    %v44 = vld [vmem:[#allocation2] sm:$0xff]
    %v45 = vld [vmem:[#allocation4] sm:$0xff]
    %v46 = vld [vmem:[#allocation4 + $0x8] sm:$0xff]
    %v47 = vld [vmem:[%s2] sm:$0x1]
    %v49 = vperm.slane %v47, 0
    %vm51 = vcmask 130048
    %v53 = vsel %vm51, %v44, 0
    %55 = vmatpush.msra.mxu0 0.0
    %56 = vmatpush.msra.mxu0 0.0
    %57 = vmatpush.msra.mxu0 0.0
    %58 = vmatpush.msra.mxu0 0.0
    %59 = vmatpush.msra.mxu0 0.0
    %60 = vmatpush.msra.mxu0 0.0
    %61 = vmatpush.msra.mxu0 0.0
    %62 = vmatpush.msra.mxu0 0.0
    %63 = vmatpush.msra.mxu0 0.0
    %64 = vmatpush.msra.mxu0 0.0
    %65 = vmatpush.msra.mxu0 0.0
    %66 = vmatpush.msra.mxu0 0.0
    %67 = vmatpush.msra.mxu0 0.0
    %68 = vmatpush.msra.mxu0 0.0
    %69 = vmatpush.msra.mxu0 %v46
    %70 = vmatpush.msra.mxu0 %v45
    %71 = vmatmul.f32.gmra.mxu0 %v53
    %v72 = vpop.f32.mrf.mxu0
    %v73 = vadd.f32 %v49, %v72
    %74 = vdwg.mxu0
    %v75 = vmax.f32 %v73, 0.0
    %v76 = vld [vmem:[#allocation4] sm:$0xff]
    %v77 = vld [vmem:[#allocation4 + $0x8] sm:$0xff]
    %v78 = vld [vmem:[#allocation4 + $0x10] sm:$0xff]
    %v79 = vld [vmem:[#allocation4 + $0x18] sm:$0xff]
    %84 = vrot.lane.b32.xlu0 %v76, 96
    %v85 = vpop.permute.xlu0 %84
    %86 = vrot.lane.b32.xlu0 %v77, 96
    %v87 = vpop.permute.xlu0 %86
    %88 = vrot.lane.b32.xlu0 %v78, 96
    %v89 = vpop.permute.xlu0 %88
    %90 = vrot.lane.b32.xlu0 %v79, 96
    %v91 = vpop.permute.xlu0 %90
    %96 = vrot.lane.b32.xlu0 %v49, 96
    %v97 = vpop.permute.xlu0 %96
    %vm99 = vcmask 261120
    %v101 = vsel %vm99, %v75, 0
    %103 = vmatpush.msra.mxu0 0.0
    %104 = vmatpush.msra.mxu0 0.0
    %105 = vmatpush.msra.mxu0 0.0
    %106 = vmatpush.msra.mxu0 0.0
    %107 = vmatpush.msra.mxu0 0.0
    %108 = vmatpush.msra.mxu0 0.0
    %109 = vmatpush.msra.mxu0 0.0
    %110 = vmatpush.msra.mxu0 0.0
    %111 = vmatpush.msra.mxu0 0.0
    %112 = vmatpush.msra.mxu0 0.0
    %113 = vmatpush.msra.mxu0 0.0
    %114 = vmatpush.msra.mxu0 0.0
    %115 = vmatpush.msra.mxu0 %v91
    %116 = vmatpush.msra.mxu0 %v89
    %117 = vmatpush.msra.mxu0 %v87
    %118 = vmatpush.msra.mxu0 %v85
    %119 = vmatmul.f32.gmra.mxu0 %v101
    %v120 = vpop.f32.mrf.mxu0
    %v121 = vadd.f32 %v97, %v120
    %122 = vdwg.mxu0
    %v123 = vmax.f32 %v121, 0.0
    %124 = vrot.lane.b32.xlu0 %v76, 64
    %v125 = vpop.permute.xlu0 %124
    %126 = vrot.lane.b32.xlu0 %v77, 64
    %v127 = vpop.permute.xlu0 %126
    %128 = vrot.lane.b32.xlu0 %v78, 64
    %v129 = vpop.permute.xlu0 %128
    %130 = vrot.lane.b32.xlu0 %v79, 64
    %v131 = vpop.permute.xlu0 %130
    %136 = vrot.lane.b32.xlu0 %v49, 64
    %v137 = vpop.permute.xlu0 %136
    %v140 = vsel %vm99, %v123, 0
    %142 = vmatpush.msra.mxu0 0.0
    %143 = vmatpush.msra.mxu0 0.0
    %144 = vmatpush.msra.mxu0 0.0
    %145 = vmatpush.msra.mxu0 0.0
    %146 = vmatpush.msra.mxu0 0.0
    %147 = vmatpush.msra.mxu0 0.0
    %148 = vmatpush.msra.mxu0 0.0
    %149 = vmatpush.msra.mxu0 0.0
    %150 = vmatpush.msra.mxu0 0.0
    %151 = vmatpush.msra.mxu0 0.0
    %152 = vmatpush.msra.mxu0 0.0
    %153 = vmatpush.msra.mxu0 0.0
    %154 = vmatpush.msra.mxu0 %v131
    %155 = vmatpush.msra.mxu0 %v129
    %156 = vmatpush.msra.mxu0 %v127
    %157 = vmatpush.msra.mxu0 %v125
    %158 = vmatmul.f32.gmra.mxu0 %v140
    %v159 = vpop.f32.mrf.mxu0
    %v160 = vadd.f32 %v137, %v159
    %161 = vdwg.mxu0
    %vm162 = vcmask 31744
    %163 = vst.msk [vmem:[%s3] sm:$0xff] %vm162, %v160
    // Predicated region
    $region22: #{mlp_forward.1} parent=1 // pred_check
      _
    $region23: #{mlp_forward.1} parent=1 // pred_check_branch
      %165 = sbr.rel (0) target = $region25
    $region24: #{mlp_forward.1} parent=1 // pred_region
      _
    $region25: #{mlp_forward.1} parent=1 // pred_fallthru
      _
    // Predicated region
    $region26: #{mlp_forward.1} parent=1 // pred_check
      _
    $region27: #{mlp_forward.1} parent=1 // pred_check_branch
      %167 = sbr.rel (0) target = $region29
    $region28: #{mlp_forward.1} parent=1 // pred_region
      _
    $region29: #{mlp_forward.1} parent=1 // pred_fallthru
      _
    %168 = vsyncpa [#allocation3], 1
    %169 = vsyncpa [#allocation5], 1

</llo_original>
